<compile_context>
chip_gen: v6e
topology: v6e:2x2x1
jax: 0.10.0
libtpu: 0.0.40
codegen_flags: <defaults>
</compile_context>

<pallas_src>
import functools

import jax
import jax.numpy as jnp
import numpy as np
from jax.experimental import pallas as pl
from jax.experimental.pallas import tpu as pltpu

K_SIZE = 3   # Conv1d kernel size (padding = (k-1)//2 = 1, no bias)
TOPK = 3     # torch.topk(y, 3, dim=1)
LANE = 128


# --------------------------------------------------------------------------- #
# pass 1: per-channel spatial sums                                            #
# --------------------------------------------------------------------------- #
def _make_pool_sum_kernel(hw, tile_hw, tiles_per_split, need_mask):
    def kernel(x_ref, sum_ref):
        # x_ref:   (C, tile_hw) native-dtype VMEM -- one spatial tile
        # sum_ref: (C, 1)       f32 VMEM          -- resident accumulator over t
        s = pl.program_id(1)
        t = pl.program_id(2)

        @pl.when(t == 0)
        def _():
            sum_ref[...] = jnp.zeros_like(sum_ref)

        xb = x_ref[...].astype(jnp.float32)   # accumulate in f32, stream native dtype
        if need_mask:
            # Last (overhanging) tile: zero out columns past the true HW extent.
            g = s * tiles_per_split + t
            col = jax.lax.broadcasted_iota(jnp.int32, xb.shape, 1)
            limit = hw - g * tile_hw          # >= tile_hw for full tiles
            xb = jnp.where(col < limit, xb, 0.0)
        sum_ref[...] += jnp.sum(xb, axis=1, keepdims=True)

    return kernel


# --------------------------------------------------------------------------- #
# pass 2: gather the 3 selected channel rows per batch (HBM -> HBM DMAs)      #
# --------------------------------------------------------------------------- #
def _make_gather_kernel(batch, bsub, topk):
    guarded = (batch % bsub) != 0

    def kernel(idx_ref, x_hbm, o_hbm, sems):
        # idx_ref: (B, TOPK) int32 in SMEM (scalar prefetch)
        # x_hbm:   (B, C, HW) in HBM (pl.ANY, no auto-DMA)
        # o_hbm:   (B, TOPK, HW) in HBM (pl.ANY) -- written only via DMA
        # sems:    (bsub, TOPK) DMA semaphores
        g = pl.program_id(0)

        def dma(j, k):
            b = g * bsub + j
            return pltpu.make_async_copy(
                x_hbm.at[b, idx_ref[b, k]], o_hbm.at[b, k], sems.at[j, k])

        def start_group(j):
            for k in range(topk):
                dma(j, k).start()

        def wait_group(j):
            for k in range(topk):
                dma(j, k).wait()

        # Issue all DMAs for this group, then wait on all (overlap issue/transfer).
        for j in range(bsub):
            if guarded:
                pl.when(g * bsub + j < batch)(functools.partial(start_group, j))
            else:
                start_group(j)
        for j in range(bsub):
            if guarded:
                pl.when(g * bsub + j < batch)(functools.partial(wait_group, j))
            else:
                wait_group(j)

    return kernel


@jax.jit
def eca_layer_forward(x, conv_w):
    """x: (B, C, H, W), conv_w: (3,) f32 Conv1d weights. Returns (B, 3, H, W)."""
    B, C, H, W = x.shape
    assert C >= TOPK, "eca_layer top-k requires at least 3 channels"
    HW = H * W
    itemsize = jnp.dtype(x.dtype).itemsize

    # ---- pass-1 tiling: biggest lane-aligned tile <= ~8 MiB, or the full HW dim
    # (divisibility exception) when it already fits. No input padding is done.
    max_block_bytes = 8 * 1024 * 1024
    max_tile = max(LANE, (max_block_bytes // (C * itemsize)) // LANE * LANE)
    if HW <= max_tile:
        tile_hw = HW            # block last dim == full array dim -> always legal
        n_tiles = 1
    else:
        tile_hw = max_tile      # multiple of 128; last tile overhangs and is masked
        n_tiles = pl.cdiv(HW, tile_hw)
    need_mask = (n_tiles * tile_hw != HW)

    # 2-way split of the tile axis (both marked "parallel") so both v7x TensorCores
    # have work even at B == 1; only used when it divides evenly (no dummy tiles).
    nsplit = 2 if (n_tiles >= 2 and n_tiles % 2 == 0) else 1
    tiles_per_split = n_tiles // nsplit

    x2 = x.reshape(B, C, HW)    # free, contiguous

    partials = pl.pallas_call(
        _make_pool_sum_kernel(HW, tile_hw, tiles_per_split, need_mask),
        out_shape=jax.ShapeDtypeStruct((B, nsplit, C, 1), jnp.float32),
        grid=(B, nsplit, tiles_per_split),
        in_specs=[pl.BlockSpec(
            (None, C, tile_hw),
            lambda b, s, t: (b, 0, s * tiles_per_split + t))],
        out_specs=pl.BlockSpec((None, None, C, 1), lambda b, s, t: (b, s, 0, 0)),
        compiler_params=pltpu.CompilerParams(
            dimension_semantics=("parallel", "parallel", "arbitrary"),
            vmem_limit_bytes=32 * 1024 * 1024),
    )(x2)

    # ---- tiny (B, C) work in plain JAX: combine splits, 3-tap conv, sigmoid, top-k
    pooled = jnp.sum(partials[:, :, :, 0], axis=1) * (1.0 / HW)            # (B, C)
    pad = jnp.pad(pooled, ((0, 0), (1, 1)))
    conv = (conv_w[0] * pad[:, :-2]
            + conv_w[1] * pad[:, 1:-1]
            + conv_w[2] * pad[:, 2:])                                      # (B, C)
    y = jax.nn.sigmoid(conv)      # monotone; kept for exact parity with PyTorch
    _, idx = jax.lax.top_k(y, TOPK)                                        # (B, 3)

    # ---- pass 2: HBM->HBM row gather, several batch elements per step if rows tiny
    row_bytes = HW * itemsize
    bsub = int(max(1, min(B, 8, (256 * 1024) // max(row_bytes, 1))))
    n_groups = pl.cdiv(B, bsub)

    out2 = pl.pallas_call(
        _make_gather_kernel(B, bsub, TOPK),
        out_shape=jax.ShapeDtypeStruct((B, TOPK, HW), x.dtype),
        grid_spec=pltpu.PrefetchScalarGridSpec(
            num_scalar_prefetch=1,
            grid=(n_groups,),
            in_specs=[pl.BlockSpec(memory_space=pl.ANY)],    # x stays in HBM
            out_specs=pl.BlockSpec(memory_space=pl.ANY),     # out written via DMA
            scratch_shapes=[pltpu.SemaphoreType.DMA((bsub, TOPK))],
        ),
        compiler_params=pltpu.CompilerParams(dimension_semantics=("arbitrary",)),
    )(idx.astype(jnp.int32), x2)

    return out2.reshape(B, TOPK, H, W)


def eca_reference(x, w):
    """Pure-JAX reference of the PyTorch forward."""
    pooled = x.mean(axis=(2, 3))                                           # (B, C)
    pad = jnp.pad(pooled, ((0, 0), (1, 1)))
    conv = w[0] * pad[:, :-2] + w[1] * pad[:, 1:-1] + w[2] * pad[:, 2:]
    y = jax.nn.sigmoid(conv)
    _, idx = jax.lax.top_k(y, TOPK)                                        # (B, 3)
    return jnp.take_along_axis(x, idx[:, :, None, None], axis=1)


if __name__ == "__main__":
    key = jax.random.PRNGKey(0)
    kx, kw = jax.random.split(key)

    B, C, H, W = 2, 8, 16, 16
    x = jax.random.normal(kx, (B, C, H, W), dtype=jnp.float32)

    # Deterministic Conv1d(1, 1, 3, bias=False) weight init (PyTorch bound 1/sqrt(fan_in)).
    bound = 1.0 / np.sqrt(K_SIZE)
    conv_w = jax.random.uniform(kw, (K_SIZE,), dtype=jnp.float32,
                                minval=-bound, maxval=bound)

    out = jax.block_until_ready(eca_layer_forward(x, conv_w))

    ref = eca_reference(x, conv_w)
    assert out.shape == (B, TOPK, H, W)
    np.testing.assert_allclose(np.asarray(out), np.asarray(ref), rtol=1e-5, atol=1e-5)

    print("KERNEL_OK")
</pallas_src>

<mosaic_0001>
module attributes {stable_mosaic.version = 11 : i64} {
  func.func @kernel(%arg0: i32, %arg1: i32, %arg2: i32, %arg3: memref<1x8x256xf32, #tpu.memory_space<vmem>>, %arg4: memref<1x1x8x1xf32, #tpu.memory_space<vmem>>) attributes {dimension_semantics = [#tpu.dimension_semantics<parallel>, #tpu.dimension_semantics<parallel>, #tpu.dimension_semantics<arbitrary>], iteration_bounds = array<i64: 2, 1, 1>, scalar_prefetch = 0 : i64, scratch_operands = 0 : i64, tpu.core_type = #tpu.core_type<tc>, window_params = [{transform_indices = @transform_0, window_bounds = array<i64: 1, 8, 256>}, {transform_indices = @transform_1, window_bounds = array<i64: 1, 1, 8, 1>}]} {
    %c0_i32 = arith.constant 0 : i32
    %0 = arith.cmpi eq, %arg2, %c0_i32 : i32
    %1 = arith.extui %0 : i1 to i32
    %c0_i32_0 = arith.constant 0 : i32
    %2 = arith.cmpi ne, %1, %c0_i32_0 : i32
    scf.if %2 {
      %cst_11 = arith.constant 0.000000e+00 : f32
      %13 = vector.broadcast %cst_11 : f32 to vector<8x1xf32>
      %c0_12 = arith.constant 0 : index
      %c0_13 = arith.constant 0 : index
      %c0_14 = arith.constant 0 : index
      %c0_15 = arith.constant 0 : index
      %14 = vector.load %arg4[%c0_12, %c0_13, %c0_14, %c0_15] : memref<1x1x8x1xf32, #tpu.memory_space<vmem>>, vector<1x1x8x1xf32>
      %15 = vector.shape_cast %14 : vector<1x1x8x1xf32> to vector<8x1xf32>
      %16 = vector.shape_cast %13 : vector<8x1xf32> to vector<1x1x8x1xf32>
      tpu.vector_store %arg4[%c0_12, %c0_13, %c0_14, %c0_15], %16 {strides = array<i32>} : memref<1x1x8x1xf32, #tpu.memory_space<vmem>>, vector<1x1x8x1xf32>,
    } else {
    }
    %c0 = arith.constant 0 : index
    %c0_1 = arith.constant 0 : index
    %c0_2 = arith.constant 0 : index
    %3 = vector.load %arg3[%c0, %c0_1, %c0_2] : memref<1x8x256xf32, #tpu.memory_space<vmem>>, vector<1x8x256xf32>
    %4 = vector.shape_cast %3 : vector<1x8x256xf32> to vector<8x256xf32>
    %c0_3 = arith.constant 0 : index
    %c0_4 = arith.constant 0 : index
    %c0_5 = arith.constant 0 : index
    %c0_6 = arith.constant 0 : index
    %5 = vector.load %arg4[%c0_3, %c0_4, %c0_5, %c0_6] : memref<1x1x8x1xf32, #tpu.memory_space<vmem>>, vector<1x1x8x1xf32>
    %6 = vector.shape_cast %5 : vector<1x1x8x1xf32> to vector<8x1xf32>
    %cst = arith.constant dense<0.000000e+00> : vector<8xf32>
    %7 = vector.multi_reduction <add>, %4, %cst [1] : vector<8x256xf32> to vector<8xf32>
    %8 = vector.shape_cast %7 : vector<8xf32> to vector<8x1xf32>
    %9 = arith.addf %6, %8 : vector<8x1xf32>
    %c0_7 = arith.constant 0 : index
    %c0_8 = arith.constant 0 : index
    %c0_9 = arith.constant 0 : index
    %c0_10 = arith.constant 0 : index
    %10 = vector.load %arg4[%c0_7, %c0_8, %c0_9, %c0_10] : memref<1x1x8x1xf32, #tpu.memory_space<vmem>>, vector<1x1x8x1xf32>
    %11 = vector.shape_cast %10 : vector<1x1x8x1xf32> to vector<8x1xf32>
    %12 = vector.shape_cast %9 : vector<8x1xf32> to vector<1x1x8x1xf32>
    tpu.vector_store %arg4[%c0_7, %c0_8, %c0_9, %c0_10], %12 {strides = array<i32>} : memref<1x1x8x1xf32, #tpu.memory_space<vmem>>, vector<1x1x8x1xf32>,
    return
  }
  func.func @transform_0(%arg0: i32, %arg1: i32, %arg2: i32) -> (i32, i32, i32) {
    %c1_i32 = arith.constant 1 : i32
    %0 = arith.muli %arg1, %c1_i32 : i32
    %1 = arith.addi %0, %arg2 : i32
    %c0_i32 = arith.constant 0 : i32
    %c0_i32_0 = arith.constant 0 : i32
    return %arg0, %c0_i32, %1 : i32, i32, i32
  }
  func.func @transform_1(%arg0: i32, %arg1: i32, %arg2: i32) -> (i32, i32, i32, i32) {
    %c0_i32 = arith.constant 0 : i32
    %c0_i32_0 = arith.constant 0 : i32
    %c0_i32_1 = arith.constant 0 : i32
    return %arg0, %arg1, %c0_i32, %c0_i32_0 : i32, i32, i32, i32
  }
}

module attributes {stable_mosaic.version = 11 : i64} {
  func.func @kernel(%arg0: i32, %arg1: memref<2x3xi32, #tpu.memory_space<smem>>, %arg2: memref<2x8x256xf32, #tpu.memory_space<any>>, %arg3: memref<2x3x256xf32, #tpu.memory_space<any>>, %arg4: memref<2x3x!tpu.dma_semaphore, #tpu.memory_space<semaphore_mem>>) attributes {dimension_semantics = [#tpu.dimension_semantics<arbitrary>], iteration_bounds = array<i64: 1>, scalar_prefetch = 1 : i64, scratch_operands = 1 : i64, tpu.core_type = #tpu.core_type<tc>, window_params = [{}, {}]} {
    %c2_i32 = arith.constant 2 : i32
    %0 = arith.muli %arg0, %c2_i32 : i32
    %c0_i32 = arith.constant 0 : i32
    %1 = arith.addi %0, %c0_i32 : i32
    %2 = arith.index_cast %1 : i32 to index
    %c0 = arith.constant 0 : index
    %3 = memref.load %arg1[%2, %c0] : memref<2x3xi32, #tpu.memory_space<smem>>
    %c0_i32_0 = arith.constant 0 : i32
    %c0_i32_1 = arith.constant 0 : i32
    %c0_i32_2 = arith.constant 0 : i32
    %c0_i32_3 = arith.constant 0 : i32
    %4 = tpu.memref_slice %arg2[%1, %3, %c0_i32_3] : memref<2x8x256xf32, #tpu.memory_space<any>> -> memref<1x1x256xf32, #tpu.memory_space<any>>
    %5 = tpu.memref_squeeze %4 : memref<1x1x256xf32, #tpu.memory_space<any>> -> memref<256xf32, #tpu.memory_space<any>>
    %c0_i32_4 = arith.constant 0 : i32
    %6 = tpu.memref_slice %arg3[%1, %c0_i32_0, %c0_i32_4] : memref<2x3x256xf32, #tpu.memory_space<any>> -> memref<1x1x256xf32, #tpu.memory_space<any>>
    %7 = tpu.memref_squeeze %6 : memref<1x1x256xf32, #tpu.memory_space<any>> -> memref<256xf32, #tpu.memory_space<any>>
    %8 = tpu.memref_slice %arg4[%c0_i32_1, %c0_i32_2] : memref<2x3x!tpu.dma_semaphore, #tpu.memory_space<semaphore_mem>> -> memref<1x1x!tpu.dma_semaphore, #tpu.memory_space<semaphore_mem>>
    %9 = tpu.memref_squeeze %8 : memref<1x1x!tpu.dma_semaphore, #tpu.memory_space<semaphore_mem>> -> memref<!tpu.dma_semaphore, #tpu.memory_space<semaphore_mem>>
    tpu.enqueue_dma source(%5 : memref<256xf32, #tpu.memory_space<any>>) target(%7 : memref<256xf32, #tpu.memory_space<any>>) target_semaphore(%9 : memref<!tpu.dma_semaphore, #tpu.memory_space<semaphore_mem>>)
    %c2_i32_5 = arith.constant 2 : i32
    %10 = arith.muli %arg0, %c2_i32_5 : i32
    %c0_i32_6 = arith.constant 0 : i32
    %11 = arith.addi %10, %c0_i32_6 : i32
    %12 = arith.index_cast %11 : i32 to index
    %c1 = arith.constant 1 : index
    %13 = memref.load %arg1[%12, %c1] : memref<2x3xi32, #tpu.memory_space<smem>>
    %c1_i32 = arith.constant 1 : i32
    %c0_i32_7 = arith.constant 0 : i32
    %c1_i32_8 = arith.constant 1 : i32
    %c0_i32_9 = arith.constant 0 : i32
    %14 = tpu.memref_slice %arg2[%11, %13, %c0_i32_9] : memref<2x8x256xf32, #tpu.memory_space<any>> -> memref<1x1x256xf32, #tpu.memory_space<any>>
    %15 = tpu.memref_squeeze %14 : memref<1x1x256xf32, #tpu.memory_space<any>> -> memref<256xf32, #tpu.memory_space<any>>
    %c0_i32_10 = arith.constant 0 : i32
    %16 = tpu.memref_slice %arg3[%11, %c1_i32, %c0_i32_10] : memref<2x3x256xf32, #tpu.memory_space<any>> -> memref<1x1x256xf32, #tpu.memory_space<any>>
    %17 = tpu.memref_squeeze %16 : memref<1x1x256xf32, #tpu.memory_space<any>> -> memref<256xf32, #tpu.memory_space<any>>
    %18 = tpu.memref_slice %arg4[%c0_i32_7, %c1_i32_8] : memref<2x3x!tpu.dma_semaphore, #tpu.memory_space<semaphore_mem>> -> memref<1x1x!tpu.dma_semaphore, #tpu.memory_space<semaphore_mem>>
    %19 = tpu.memref_squeeze %18 : memref<1x1x!tpu.dma_semaphore, #tpu.memory_space<semaphore_mem>> -> memref<!tpu.dma_semaphore, #tpu.memory_space<semaphore_mem>>
    tpu.enqueue_dma source(%15 : memref<256xf32, #tpu.memory_space<any>>) target(%17 : memref<256xf32, #tpu.memory_space<any>>) target_semaphore(%19 : memref<!tpu.dma_semaphore, #tpu.memory_space<semaphore_mem>>)
    %c2_i32_11 = arith.constant 2 : i32
    %20 = arith.muli %arg0, %c2_i32_11 : i32
    %c0_i32_12 = arith.constant 0 : i32
    %21 = arith.addi %20, %c0_i32_12 : i32
    %22 = arith.index_cast %21 : i32 to index
    %c2 = arith.constant 2 : index
    %23 = memref.load %arg1[%22, %c2] : memref<2x3xi32, #tpu.memory_space<smem>>
    %c2_i32_13 = arith.constant 2 : i32
    %c0_i32_14 = arith.constant 0 : i32
    %c2_i32_15 = arith.constant 2 : i32
    %c0_i32_16 = arith.constant 0 : i32
    %24 = tpu.memref_slice %arg2[%21, %23, %c0_i32_16] : memref<2x8x256xf32, #tpu.memory_space<any>> -> memref<1x1x256xf32, #tpu.memory_space<any>>
    %25 = tpu.memref_squeeze %24 : memref<1x1x256xf32, #tpu.memory_space<any>> -> memref<256xf32, #tpu.memory_space<any>>
    %c0_i32_17 = arith.constant 0 : i32
    %26 = tpu.memref_slice %arg3[%21, %c2_i32_13, %c0_i32_17] : memref<2x3x256xf32, #tpu.memory_space<any>> -> memref<1x1x256xf32, #tpu.memory_space<any>>
    %27 = tpu.memref_squeeze %26 : memref<1x1x256xf32, #tpu.memory_space<any>> -> memref<256xf32, #tpu.memory_space<any>>
    %28 = tpu.memref_slice %arg4[%c0_i32_14, %c2_i32_15] : memref<2x3x!tpu.dma_semaphore, #tpu.memory_space<semaphore_mem>> -> memref<1x1x!tpu.dma_semaphore, #tpu.memory_space<semaphore_mem>>
    %29 = tpu.memref_squeeze %28 : memref<1x1x!tpu.dma_semaphore, #tpu.memory_space<semaphore_mem>> -> memref<!tpu.dma_semaphore, #tpu.memory_space<semaphore_mem>>
    tpu.enqueue_dma source(%25 : memref<256xf32, #tpu.memory_space<any>>) target(%27 : memref<256xf32, #tpu.memory_space<any>>) target_semaphore(%29 : memref<!tpu.dma_semaphore, #tpu.memory_space<semaphore_mem>>)
    %c2_i32_18 = arith.constant 2 : i32
    %30 = arith.muli %arg0, %c2_i32_18 : i32
    %c1_i32_19 = arith.constant 1 : i32
    %31 = arith.addi %30, %c1_i32_19 : i32
    %32 = arith.index_cast %31 : i32 to index
    %c0_20 = arith.constant 0 : index
    %33 = memref.load %arg1[%32, %c0_20] : memref<2x3xi32, #tpu.memory_space<smem>>
    %c0_i32_21 = arith.constant 0 : i32
    %c1_i32_22 = arith.constant 1 : i32
    %c0_i32_23 = arith.constant 0 : i32
    %c0_i32_24 = arith.constant 0 : i32
    %34 = tpu.memref_slice %arg2[%31, %33, %c0_i32_24] : memref<2x8x256xf32, #tpu.memory_space<any>> -> memref<1x1x256xf32, #tpu.memory_space<any>>
    %35 = tpu.memref_squeeze %34 : memref<1x1x256xf32, #tpu.memory_space<any>> -> memref<256xf32, #tpu.memory_space<any>>
    %c0_i32_25 = arith.constant 0 : i32
    %36 = tpu.memref_slice %arg3[%31, %c0_i32_21, %c0_i32_25] : memref<2x3x256xf32, #tpu.memory_space<any>> -> memref<1x1x256xf32, #tpu.memory_space<any>>
    %37 = tpu.memref_squeeze %36 : memref<1x1x256xf32, #tpu.memory_space<any>> -> memref<256xf32, #tpu.memory_space<any>>
    %38 = tpu.memref_slice %arg4[%c1_i32_22, %c0_i32_23] : memref<2x3x!tpu.dma_semaphore, #tpu.memory_space<semaphore_mem>> -> memref<1x1x!tpu.dma_semaphore, #tpu.memory_space<semaphore_mem>>
    %39 = tpu.memref_squeeze %38 : memref<1x1x!tpu.dma_semaphore, #tpu.memory_space<semaphore_mem>> -> memref<!tpu.dma_semaphore, #tpu.memory_space<semaphore_mem>>
    tpu.enqueue_dma source(%35 : memref<256xf32, #tpu.memory_space<any>>) target(%37 : memref<256xf32, #tpu.memory_space<any>>) target_semaphore(%39 : memref<!tpu.dma_semaphore, #tpu.memory_space<semaphore_mem>>)
    %c2_i32_26 = arith.constant 2 : i32
    %40 = arith.muli %arg0, %c2_i32_26 : i32
    %c1_i32_27 = arith.constant 1 : i32
    %41 = arith.addi %40, %c1_i32_27 : i32
    %42 = arith.index_cast %41 : i32 to index
    %c1_28 = arith.constant 1 : index
    %43 = memref.load %arg1[%42, %c1_28] : memref<2x3xi32, #tpu.memory_space<smem>>
    %c1_i32_29 = arith.constant 1 : i32
    %c1_i32_30 = arith.constant 1 : i32
    %c1_i32_31 = arith.constant 1 : i32
    %c0_i32_32 = arith.constant 0 : i32
    %44 = tpu.memref_slice %arg2[%41, %43, %c0_i32_32] : memref<2x8x256xf32, #tpu.memory_space<any>> -> memref<1x1x256xf32, #tpu.memory_space<any>>
    %45 = tpu.memref_squeeze %44 : memref<1x1x256xf32, #tpu.memory_space<any>> -> memref<256xf32, #tpu.memory_space<any>>
    %c0_i32_33 = arith.constant 0 : i32
    %46 = tpu.memref_slice %arg3[%41, %c1_i32_29, %c0_i32_33] : memref<2x3x256xf32, #tpu.memory_space<any>> -> memref<1x1x256xf32, #tpu.memory_space<any>>
    %47 = tpu.memref_squeeze %46 : memref<1x1x256xf32, #tpu.memory_space<any>> -> memref<256xf32, #tpu.memory_space<any>>
    %48 = tpu.memref_slice %arg4[%c1_i32_30, %c1_i32_31] : memref<2x3x!tpu.dma_semaphore, #tpu.memory_space<semaphore_mem>> -> memref<1x1x!tpu.dma_semaphore, #tpu.memory_space<semaphore_mem>>
    %49 = tpu.memref_squeeze %48 : memref<1x1x!tpu.dma_semaphore, #tpu.memory_space<semaphore_mem>> -> memref<!tpu.dma_semaphore, #tpu.memory_space<semaphore_mem>>
    tpu.enqueue_dma source(%45 : memref<256xf32, #tpu.memory_space<any>>) target(%47 : memref<256xf32, #tpu.memory_space<any>>) target_semaphore(%49 : memref<!tpu.dma_semaphore, #tpu.memory_space<semaphore_mem>>)
    %c2_i32_34 = arith.constant 2 : i32
    %50 = arith.muli %arg0, %c2_i32_34 : i32
    %c1_i32_35 = arith.constant 1 : i32
    %51 = arith.addi %50, %c1_i32_35 : i32
    %52 = arith.index_cast %51 : i32 to index
    %c2_36 = arith.constant 2 : index
    %53 = memref.load %arg1[%52, %c2_36] : memref<2x3xi32, #tpu.memory_space<smem>>
    %c2_i32_37 = arith.constant 2 : i32
    %c1_i32_38 = arith.constant 1 : i32
    %c2_i32_39 = arith.constant 2 : i32
    %c0_i32_40 = arith.constant 0 : i32
    %54 = tpu.memref_slice %arg2[%51, %53, %c0_i32_40] : memref<2x8x256xf32, #tpu.memory_space<any>> -> memref<1x1x256xf32, #tpu.memory_space<any>>
    %55 = tpu.memref_squeeze %54 : memref<1x1x256xf32, #tpu.memory_space<any>> -> memref<256xf32, #tpu.memory_space<any>>
    %c0_i32_41 = arith.constant 0 : i32
    %56 = tpu.memref_slice %arg3[%51, %c2_i32_37, %c0_i32_41] : memref<2x3x256xf32, #tpu.memory_space<any>> -> memref<1x1x256xf32, #tpu.memory_space<any>>
    %57 = tpu.memref_squeeze %56 : memref<1x1x256xf32, #tpu.memory_space<any>> -> memref<256xf32, #tpu.memory_space<any>>
    %58 = tpu.memref_slice %arg4[%c1_i32_38, %c2_i32_39] : memref<2x3x!tpu.dma_semaphore, #tpu.memory_space<semaphore_mem>> -> memref<1x1x!tpu.dma_semaphore, #tpu.memory_space<semaphore_mem>>
    %59 = tpu.memref_squeeze %58 : memref<1x1x!tpu.dma_semaphore, #tpu.memory_space<semaphore_mem>> -> memref<!tpu.dma_semaphore, #tpu.memory_space<semaphore_mem>>
    tpu.enqueue_dma source(%55 : memref<256xf32, #tpu.memory_space<any>>) target(%57 : memref<256xf32, #tpu.memory_space<any>>) target_semaphore(%59 : memref<!tpu.dma_semaphore, #tpu.memory_space<semaphore_mem>>)
    %c2_i32_42 = arith.constant 2 : i32
    %60 = arith.muli %arg0, %c2_i32_42 : i32
    %c0_i32_43 = arith.constant 0 : i32
    %61 = arith.addi %60, %c0_i32_43 : i32
    %62 = arith.index_cast %61 : i32 to index
    %c0_44 = arith.constant 0 : index
    %63 = memref.load %arg1[%62, %c0_44] : memref<2x3xi32, #tpu.memory_space<smem>>
    %c0_i32_45 = arith.constant 0 : i32
    %c0_i32_46 = arith.constant 0 : i32
    %c0_i32_47 = arith.constant 0 : i32
    %c0_i32_48 = arith.constant 0 : i32
    %64 = tpu.memref_slice %arg2[%61, %63, %c0_i32_48] : memref<2x8x256xf32, #tpu.memory_space<any>> -> memref<1x1x256xf32, #tpu.memory_space<any>>
    %65 = tpu.memref_squeeze %64 : memref<1x1x256xf32, #tpu.memory_space<any>> -> memref<256xf32, #tpu.memory_space<any>>
    %c0_i32_49 = arith.constant 0 : i32
    %66 = tpu.memref_slice %arg3[%61, %c0_i32_45, %c0_i32_49] : memref<2x3x256xf32, #tpu.memory_space<any>> -> memref<1x1x256xf32, #tpu.memory_space<any>>
    %67 = tpu.memref_squeeze %66 : memref<1x1x256xf32, #tpu.memory_space<any>> -> memref<256xf32, #tpu.memory_space<any>>
    %68 = tpu.memref_slice %arg4[%c0_i32_46, %c0_i32_47] : memref<2x3x!tpu.dma_semaphore, #tpu.memory_space<semaphore_mem>> -> memref<1x1x!tpu.dma_semaphore, #tpu.memory_space<semaphore_mem>>
    %69 = tpu.memref_squeeze %68 : memref<1x1x!tpu.dma_semaphore, #tpu.memory_space<semaphore_mem>> -> memref<!tpu.dma_semaphore, #tpu.memory_space<semaphore_mem>>
    tpu.wait_dma2 semaphore(%69 : memref<!tpu.dma_semaphore, #tpu.memory_space<semaphore_mem>>) src(%65 : memref<256xf32, #tpu.memory_space<any>>) dst(%67 : memref<256xf32, #tpu.memory_space<any>>)
    %c2_i32_50 = arith.constant 2 : i32
    %70 = arith.muli %arg0, %c2_i32_50 : i32
    %c0_i32_51 = arith.constant 0 : i32
    %71 = arith.addi %70, %c0_i32_51 : i32
    %72 = arith.index_cast %71 : i32 to index
    %c1_52 = arith.constant 1 : index
    %73 = memref.load %arg1[%72, %c1_52] : memref<2x3xi32, #tpu.memory_space<smem>>
    %c1_i32_53 = arith.constant 1 : i32
    %c0_i32_54 = arith.constant 0 : i32
    %c1_i32_55 = arith.constant 1 : i32
    %c0_i32_56 = arith.constant 0 : i32
    %74 = tpu.memref_slice %arg2[%71, %73, %c0_i32_56] : memref<2x8x256xf32, #tpu.memory_space<any>> -> memref<1x1x256xf32, #tpu.memory_space<any>>
    %75 = tpu.memref_squeeze %74 : memref<1x1x256xf32, #tpu.memory_space<any>> -> memref<256xf32, #tpu.memory_space<any>>
    %c0_i32_57 = arith.constant 0 : i32
    %76 = tpu.memref_slice %arg3[%71, %c1_i32_53, %c0_i32_57] : memref<2x3x256xf32, #tpu.memory_space<any>> -> memref<1x1x256xf32, #tpu.memory_space<any>>
    %77 = tpu.memref_squeeze %76 : memref<1x1x256xf32, #tpu.memory_space<any>> -> memref<256xf32, #tpu.memory_space<any>>
    %78 = tpu.memref_slice %arg4[%c0_i32_54, %c1_i32_55] : memref<2x3x!tpu.dma_semaphore, #tpu.memory_space<semaphore_mem>> -> memref<1x1x!tpu.dma_semaphore, #tpu.memory_space<semaphore_mem>>
    %79 = tpu.memref_squeeze %78 : memref<1x1x!tpu.dma_semaphore, #tpu.memory_space<semaphore_mem>> -> memref<!tpu.dma_semaphore, #tpu.memory_space<semaphore_mem>>
    tpu.wait_dma2 semaphore(%79 : memref<!tpu.dma_semaphore, #tpu.memory_space<semaphore_mem>>) src(%75 : memref<256xf32, #tpu.memory_space<any>>) dst(%77 : memref<256xf32, #tpu.memory_space<any>>)
    %c2_i32_58 = arith.constant 2 : i32
    %80 = arith.muli %arg0, %c2_i32_58 : i32
    %c0_i32_59 = arith.constant 0 : i32
    %81 = arith.addi %80, %c0_i32_59 : i32
    %82 = arith.index_cast %81 : i32 to index
    %c2_60 = arith.constant 2 : index
    %83 = memref.load %arg1[%82, %c2_60] : memref<2x3xi32, #tpu.memory_space<smem>>
    %c2_i32_61 = arith.constant 2 : i32
    %c0_i32_62 = arith.constant 0 : i32
    %c2_i32_63 = arith.constant 2 : i32
    %c0_i32_64 = arith.constant 0 : i32
    %84 = tpu.memref_slice %arg2[%81, %83, %c0_i32_64] : memref<2x8x256xf32, #tpu.memory_space<any>> -> memref<1x1x256xf32, #tpu.memory_space<any>>
    %85 = tpu.memref_squeeze %84 : memref<1x1x256xf32, #tpu.memory_space<any>> -> memref<256xf32, #tpu.memory_space<any>>
    %c0_i32_65 = arith.constant 0 : i32
    %86 = tpu.memref_slice %arg3[%81, %c2_i32_61, %c0_i32_65] : memref<2x3x256xf32, #tpu.memory_space<any>> -> memref<1x1x256xf32, #tpu.memory_space<any>>
    %87 = tpu.memref_squeeze %86 : memref<1x1x256xf32, #tpu.memory_space<any>> -> memref<256xf32, #tpu.memory_space<any>>
    %88 = tpu.memref_slice %arg4[%c0_i32_62, %c2_i32_63] : memref<2x3x!tpu.dma_semaphore, #tpu.memory_space<semaphore_mem>> -> memref<1x1x!tpu.dma_semaphore, #tpu.memory_space<semaphore_mem>>
    %89 = tpu.memref_squeeze %88 : memref<1x1x!tpu.dma_semaphore, #tpu.memory_space<semaphore_mem>> -> memref<!tpu.dma_semaphore, #tpu.memory_space<semaphore_mem>>
    tpu.wait_dma2 semaphore(%89 : memref<!tpu.dma_semaphore, #tpu.memory_space<semaphore_mem>>) src(%85 : memref<256xf32, #tpu.memory_space<any>>) dst(%87 : memref<256xf32, #tpu.memory_space<any>>)
    %c2_i32_66 = arith.constant 2 : i32
    %90 = arith.muli %arg0, %c2_i32_66 : i32
    %c1_i32_67 = arith.constant 1 : i32
    %91 = arith.addi %90, %c1_i32_67 : i32
    %92 = arith.index_cast %91 : i32 to index
    %c0_68 = arith.constant 0 : index
    %93 = memref.load %arg1[%92, %c0_68] : memref<2x3xi32, #tpu.memory_space<smem>>
    %c0_i32_69 = arith.constant 0 : i32
    %c1_i32_70 = arith.constant 1 : i32
    %c0_i32_71 = arith.constant 0 : i32
    %c0_i32_72 = arith.constant 0 : i32
    %94 = tpu.memref_slice %arg2[%91, %93, %c0_i32_72] : memref<2x8x256xf32, #tpu.memory_space<any>> -> memref<1x1x256xf32, #tpu.memory_space<any>>
    %95 = tpu.memref_squeeze %94 : memref<1x1x256xf32, #tpu.memory_space<any>> -> memref<256xf32, #tpu.memory_space<any>>
    %c0_i32_73 = arith.constant 0 : i32
    %96 = tpu.memref_slice %arg3[%91, %c0_i32_69, %c0_i32_73] : memref<2x3x256xf32, #tpu.memory_space<any>> -> memref<1x1x256xf32, #tpu.memory_space<any>>
    %97 = tpu.memref_squeeze %96 : memref<1x1x256xf32, #tpu.memory_space<any>> -> memref<256xf32, #tpu.memory_space<any>>
    %98 = tpu.memref_slice %arg4[%c1_i32_70, %c0_i32_71] : memref<2x3x!tpu.dma_semaphore, #tpu.memory_space<semaphore_mem>> -> memref<1x1x!tpu.dma_semaphore, #tpu.memory_space<semaphore_mem>>
    %99 = tpu.memref_squeeze %98 : memref<1x1x!tpu.dma_semaphore, #tpu.memory_space<semaphore_mem>> -> memref<!tpu.dma_semaphore, #tpu.memory_space<semaphore_mem>>
    tpu.wait_dma2 semaphore(%99 : memref<!tpu.dma_semaphore, #tpu.memory_space<semaphore_mem>>) src(%95 : memref<256xf32, #tpu.memory_space<any>>) dst(%97 : memref<256xf32, #tpu.memory_space<any>>)
    %c2_i32_74 = arith.constant 2 : i32
    %100 = arith.muli %arg0, %c2_i32_74 : i32
    %c1_i32_75 = arith.constant 1 : i32
    %101 = arith.addi %100, %c1_i32_75 : i32
    %102 = arith.index_cast %101 : i32 to index
    %c1_76 = arith.constant 1 : index
    %103 = memref.load %arg1[%102, %c1_76] : memref<2x3xi32, #tpu.memory_space<smem>>
    %c1_i32_77 = arith.constant 1 : i32
    %c1_i32_78 = arith.constant 1 : i32
    %c1_i32_79 = arith.constant 1 : i32
    %c0_i32_80 = arith.constant 0 : i32
    %104 = tpu.memref_slice %arg2[%101, %103, %c0_i32_80] : memref<2x8x256xf32, #tpu.memory_space<any>> -> memref<1x1x256xf32, #tpu.memory_space<any>>
    %105 = tpu.memref_squeeze %104 : memref<1x1x256xf32, #tpu.memory_space<any>> -> memref<256xf32, #tpu.memory_space<any>>
    %c0_i32_81 = arith.constant 0 : i32
    %106 = tpu.memref_slice %arg3[%101, %c1_i32_77, %c0_i32_81] : memref<2x3x256xf32, #tpu.memory_space<any>> -> memref<1x1x256xf32, #tpu.memory_space<any>>
    %107 = tpu.memref_squeeze %106 : memref<1x1x256xf32, #tpu.memory_space<any>> -> memref<256xf32, #tpu.memory_space<any>>
    %108 = tpu.memref_slice %arg4[%c1_i32_78, %c1_i32_79] : memref<2x3x!tpu.dma_semaphore, #tpu.memory_space<semaphore_mem>> -> memref<1x1x!tpu.dma_semaphore, #tpu.memory_space<semaphore_mem>>
    %109 = tpu.memref_squeeze %108 : memref<1x1x!tpu.dma_semaphore, #tpu.memory_space<semaphore_mem>> -> memref<!tpu.dma_semaphore, #tpu.memory_space<semaphore_mem>>
    tpu.wait_dma2 semaphore(%109 : memref<!tpu.dma_semaphore, #tpu.memory_space<semaphore_mem>>) src(%105 : memref<256xf32, #tpu.memory_space<any>>) dst(%107 : memref<256xf32, #tpu.memory_space<any>>)
    %c2_i32_82 = arith.constant 2 : i32
    %110 = arith.muli %arg0, %c2_i32_82 : i32
    %c1_i32_83 = arith.constant 1 : i32
    %111 = arith.addi %110, %c1_i32_83 : i32
    %112 = arith.index_cast %111 : i32 to index
    %c2_84 = arith.constant 2 : index
    %113 = memref.load %arg1[%112, %c2_84] : memref<2x3xi32, #tpu.memory_space<smem>>
    %c2_i32_85 = arith.constant 2 : i32
    %c1_i32_86 = arith.constant 1 : i32
    %c2_i32_87 = arith.constant 2 : i32
    %c0_i32_88 = arith.constant 0 : i32
    %114 = tpu.memref_slice %arg2[%111, %113, %c0_i32_88] : memref<2x8x256xf32, #tpu.memory_space<any>> -> memref<1x1x256xf32, #tpu.memory_space<any>>
    %115 = tpu.memref_squeeze %114 : memref<1x1x256xf32, #tpu.memory_space<any>> -> memref<256xf32, #tpu.memory_space<any>>
    %c0_i32_89 = arith.constant 0 : i32
    %116 = tpu.memref_slice %arg3[%111, %c2_i32_85, %c0_i32_89] : memref<2x3x256xf32, #tpu.memory_space<any>> -> memref<1x1x256xf32, #tpu.memory_space<any>>
    %117 = tpu.memref_squeeze %116 : memref<1x1x256xf32, #tpu.memory_space<any>> -> memref<256xf32, #tpu.memory_space<any>>
    %118 = tpu.memref_slice %arg4[%c1_i32_86, %c2_i32_87] : memref<2x3x!tpu.dma_semaphore, #tpu.memory_space<semaphore_mem>> -> memref<1x1x!tpu.dma_semaphore, #tpu.memory_space<semaphore_mem>>
    %119 = tpu.memref_squeeze %118 : memref<1x1x!tpu.dma_semaphore, #tpu.memory_space<semaphore_mem>> -> memref<!tpu.dma_semaphore, #tpu.memory_space<semaphore_mem>>
    tpu.wait_dma2 semaphore(%119 : memref<!tpu.dma_semaphore, #tpu.memory_space<semaphore_mem>>) src(%115 : memref<256xf32, #tpu.memory_space<any>>) dst(%117 : memref<256xf32, #tpu.memory_space<any>>)
    return
  }
}

</mosaic_0001>

<llo_original>
// kernel: eca_layer_forward.2
$region0: #{eca_layer_forward.2}
  #allocation0 [shape = 'u32[]', space=smem, size = 0x4, offset = 0x4, fixed_abs, tag = 'smem constant byte address 0x4 - core index']
  #allocation1 [shape = 'u32[144,128]{1,0:T(1,128)}', space=vmem, size = 0x12000, scoped, tag = 'internal scratch']
  %s0 = inlined_call_operand.vmem [shape: f32[2,8,256], index: 0, kind: input, shape index: {}]
  %s1 = inlined_call_operand.vmem [shape: f32[2,1,8,1], index: 1, kind: output, shape index: {}]
  %s2 = sld [smem:[#allocation0]]
  $region41: #{eca_layer_forward.2} parent=0
    _
  %s4 = ssub.s32 1, %s2
  %s5 = scalar_select 0, %s4, %s2
  loop: start=0, step=1, limit=4
  $region2: #{eca_layer_forward.2} parent=0 // loop_pre_header
    _
  $region3: #{eca_layer_forward.2} parent=0 // loop_header
    %s7 = sphi 0, %s11
    %p8 = scmp.ge.s32.totalorder %s7, 4
    %s14 = sphi 0, %s33
    %s15 = sphi 0, %s29
    %s16 = sphi 0, %s25
    %s17 = sphi 0, %s14
    %s18 = sphi 0, %s15
    %s19 = sphi 0, %s16
    %s20 = sphi 0, %s17
    %s21 = sphi 0, %s18
    %s22 = sphi 0, %s19
    %s40 = sphi 0, %s42
    %s43 = sphi 0, %s40
    %s44 = sphi 0, %s43
    %s60 = sphi 0, %s44
    %s68 = sphi 0, %s70
    %s71 = sphi 0, %s68
    %s72 = sphi 0, %s71
    %s88 = sphi 0, %s72
  $region4: #{eca_layer_forward.2} parent=0 // loop_header_branch
    %10 = sbr.rel (%p8) target = $region8
  $region5: #{eca_layer_forward.2} parent=0 // loop_body
    %s12 = ssub.s32 %s7, 1
    %s13 = ssub.s32 %s7, 2
    %s23 = sadd.s32 1, %s16
    %p24 = scmp.ge.s32.totalorder %s23, 1
    %s25 = scalar_select %p24, 0, %s23
    %s26 = sadd.s32 1, %s15
    %s27 = scalar_select %p24, %s26, %s15
    %p28 = scmp.ge.s32.totalorder %s27, 1
    %s29 = scalar_select %p28, 0, %s27
    %s30 = sadd.s32 1, %s14
    %s31 = scalar_select %p28, %s30, %s14
    %p32 = scmp.ge.s32.totalorder %s31, 2
    %s33 = scalar_select %p32, 0, %s31
    %s34 = sadd.s32 %s15, %s16
    %s35 = sadd.s32 %s29, %s25
    %s36 = ssub.s32 %s14, %s33
    %s37 = ssub.s32 %s34, %s35
    %s38 = sor.u32 %s36, %s37
    %p39 = scmp.eq.s32.totalorder %s38, 0
    %s41 = sadd.s32 %s40, 1
    %s42 = scalar_select %p39, %s40, %s41
    %p45 = pneg %p39
    %p46 = scmp.eq.s32.totalorder %s7, 1
    %p47 = por %p45, %p46
    %p48 = scmp.ne.s32.totalorder %s40, %s43
    %p49 = scmp.eq.s32.totalorder %s7, 0
    %p50 = por %p48, %p49
    %p51 = scmp.ne.s32.totalorder %s40, %s43
    %p52 = scmp.eq.s32.totalorder %s12, 1
    %p53 = por %p51, %p52
    %p54 = scmp.ne.s32.totalorder %s43, %s44
    %p55 = scmp.eq.s32.totalorder %s12, 0
    %p56 = por %p54, %p55
    %p57 = scmp.ne.s32.totalorder %s43, %s44
    %p58 = scmp.eq.s32.totalorder %s13, 1
    %p59 = por %p57, %p58
    %p61 = scmp.ne.s32.totalorder %s44, %s60
    %p62 = scmp.eq.s32.totalorder %s13, 0
    %p63 = por %p61, %p62
    %s64 = ssub.s32 %s14, %s33
    %s65 = ssub.s32 %s15, %s29
    %s66 = sor.u32 %s64, %s65
    %p67 = scmp.eq.s32.totalorder %s66, 0
    %s69 = sadd.s32 %s68, 1
    %s70 = scalar_select %p67, %s68, %s69
    %p73 = pneg %p67
    %p74 = scmp.eq.s32.totalorder %s7, 1
    %p75 = por %p73, %p74
    %p76 = scmp.ne.s32.totalorder %s68, %s71
    %p77 = scmp.eq.s32.totalorder %s7, 0
    %p78 = por %p76, %p77
    %p79 = scmp.ne.s32.totalorder %s68, %s71
    %p80 = scmp.eq.s32.totalorder %s12, 1
    %p81 = por %p79, %p80
    %p82 = scmp.ne.s32.totalorder %s71, %s72
    %p83 = scmp.eq.s32.totalorder %s12, 0
    %p84 = por %p82, %p83
    %p85 = scmp.ne.s32.totalorder %s71, %s72
    %p86 = scmp.eq.s32.totalorder %s13, 1
    %p87 = por %p85, %p86
    %p89 = scmp.ne.s32.totalorder %s72, %s88
    %p90 = scmp.eq.s32.totalorder %s13, 0
    %p91 = por %p89, %p90
    %p92 = scmp.le.s32.totalorder 1, %s7
    %p93 = scmp.lt.s32.totalorder %s7, 3
    %p94 = pnand %p92, %p93
    %p95 = pneg %p94
    // Predicated region
    $region9: #{eca_layer_forward.2} parent=5 // pred_check
      _
    $region10: #{eca_layer_forward.2} parent=5 // pred_check_branch
      %97 = sbr.rel (%p94) target = $region12
    $region11: #{eca_layer_forward.2} parent=5 // pred_region
      %s98 = ssub.s32 %s7, 1
    $region12: #{eca_layer_forward.2} parent=5 // pred_fallthru
      _
    %p99 = scmp.lt.s32.totalorder %s7, 2
    // Predicated region
    $region13: #{eca_layer_forward.2} parent=5 // pred_check
      %p100 = pneg %p99
    $region14: #{eca_layer_forward.2} parent=5 // pred_check_branch
      %102 = sbr.rel (%p100) target = $region16
    $region15: #{eca_layer_forward.2} parent=5 // pred_region
      // Predicated region
      $region17: #{eca_layer_forward.2} parent=15 // pred_check
        %p103 = pneg %p50
      $region18: #{eca_layer_forward.2} parent=15 // pred_check_branch
        %105 = sbr.rel (%p103) target = $region20
      $region19: #{eca_layer_forward.2} parent=15 // pred_region
        %s106 = sadd.s32 %s15, %s16
        %s107 = smul.u32 2, %s106
        %p108 = scmp.lt.s32.totalorder %s14, 1
        %s109 = scalar_select %p108, %s14, 1
        %p110 = scmp.lt.s32.totalorder %s107, 1
        %s111 = scalar_select %p110, %s107, 1
        %s112 = smul.addr %s109, 2
        %s113 = sadd.s32 %s111, %s112
        %s114 = smul.addr %s113, 8
        %s115 = scalar_lea.vmem %s0, %s114
        %s116 = sadd.s32 %s15, %s16
        %s117 = smul.u32 2, %s116
      $region20: #{eca_layer_forward.2} parent=15 // pred_fallthru
        _
    $region16: #{eca_layer_forward.2} parent=5 // pred_fallthru
      _
    %p118 = scmp.le.s32.totalorder 1, %s7
    %p119 = scmp.lt.s32.totalorder %s7, 3
    %p120 = pnand %p118, %p119
    %p121 = pneg %p120
    // Predicated region
    $region21: #{eca_layer_forward.2} parent=5 // pred_check
      _
    $region22: #{eca_layer_forward.2} parent=5 // pred_check_branch
      %123 = sbr.rel (%p120) target = $region24
    $region23: #{eca_layer_forward.2} parent=5 // pred_region
      %s124 = ssub.s32 %s7, 1
      %s125 = sadd.s32 %s18, %s19
      %s126 = smul.u32 2, %s125
      %p127 = scmp.lt.s32.totalorder %s17, 1
      %s128 = scalar_select %p127, %s17, 1
      %p129 = scmp.lt.s32.totalorder %s126, 1
      %s130 = scalar_select %p129, %s126, 1
      %s131 = smul.addr %s128, 2
      %s132 = sadd.s32 %s130, %s131
      %s133 = smul.addr %s132, 8
      %s134 = scalar_lea.vmem %s0, %s133
      %p135 = pneg %p56
      %p136 = pneg %p53
      %p137 = pneg %p84
      %p138 = pneg %p81
      %p139 = scmp.lt.s32.totalorder %s17, 1
      %s140 = scalar_select %p139, %s17, 1
      %p141 = scmp.lt.s32.totalorder %s18, 0
      %s142 = scalar_select %p141, %s18, 0
      %s143 = sadd.s32 %s142, %s140
      %s144 = smul.addr %s143, 8
      %s145 = scalar_lea.vmem %s1, %s144
      %s146 = sadd.s32 %s18, %s19
      %s147 = smul.u32 2, %s146
      %p148 = scmp.lt.s32.totalorder %s17, 1
      %s149 = scalar_select %p148, %s17, 1
      %p150 = scmp.lt.s32.totalorder %s147, 1
      %s151 = scalar_select %p150, %s147, 1
      %s152 = smul.addr %s149, 2
      %s153 = sadd.s32 %s151, %s152
      %s154 = smul.addr %s153, 8
      %s155 = scalar_lea.vmem %s0, %s154
      %s156 = sadd.s32 %s18, %s19
      %s157 = smul.u32 2, %s156
      %p158 = scmp.lt.s32.totalorder %s17, 1
      %s159 = scalar_select %p158, %s17, 1
      %p160 = scmp.lt.s32.totalorder %s18, 0
      %s161 = scalar_select %p160, %s18, 0
      %s162 = sadd.s32 %s161, %s159
      %s163 = smul.addr %s162, 8
      %s164 = scalar_lea.vmem %s1, %s163
      %p165 = scmp.eq.s32.totalorder %s19, 0
      // Predicated region
      $region25: #{eca_layer_forward.2} parent=23 // pred_check
        %p166 = pneg %p165
      $region26: #{eca_layer_forward.2} parent=23 // pred_check_branch
        %168 = sbr.rel (%p166) target = $region28
      $region27: #{eca_layer_forward.2} parent=23 // pred_region
        %vm169 = vcmask 7168
        %170 = vst.msk [vmem:[%s164] sm:$0xff] %vm169, 0.0
      $region28: #{eca_layer_forward.2} parent=23 // pred_fallthru
        _
      %v171 = vld [vmem:[%s155] sm:$0xff]
      %v172 = vld [vmem:[%s155 + $0x8] sm:$0xff]
      %v173 = vld [vmem:[%s164] sm:$0xff]
      %v174 = vadd.f32 %v171, %v172
      %175 = vadd.xlane.f32.xlu0 %v174
      %v176 = vpop.xlane.xlu0 %175
      %v177 = vadd.f32 %v173, %v176
      %vm178 = vcmask 7168
      %179 = vst.msk [vmem:[%s164] sm:$0xff] %vm178, %v177
      %p180 = scmp.lt.s32.totalorder %s17, 1
      %s181 = scalar_select %p180, %s17, 1
      %p182 = scmp.lt.s32.totalorder %s18, 0
      %s183 = scalar_select %p182, %s18, 0
      %s184 = sadd.s32 %s183, %s181
      %s185 = smul.addr %s184, 8
      %s186 = scalar_lea.vmem %s1, %s185
      // Predicated region
      $region29: #{eca_layer_forward.2} parent=23 // pred_check
        %p187 = pneg %p81
      $region30: #{eca_layer_forward.2} parent=23 // pred_check_branch
        %189 = sbr.rel (%p187) target = $region32
      $region31: #{eca_layer_forward.2} parent=23 // pred_region
        _
      $region32: #{eca_layer_forward.2} parent=23 // pred_fallthru
        _
    $region24: #{eca_layer_forward.2} parent=5 // pred_fallthru
      _
    %p190 = scmp.le.s32.totalorder 2, %s7
    // Predicated region
    $region33: #{eca_layer_forward.2} parent=5 // pred_check
      %p191 = pneg %p190
    $region34: #{eca_layer_forward.2} parent=5 // pred_check_branch
      %193 = sbr.rel (%p191) target = $region36
    $region35: #{eca_layer_forward.2} parent=5 // pred_region
      %s194 = ssub.s32 %s7, 2
      // Predicated region
      $region37: #{eca_layer_forward.2} parent=35 // pred_check
        %p195 = pneg %p87
      $region38: #{eca_layer_forward.2} parent=35 // pred_check_branch
        %197 = sbr.rel (%p195) target = $region40
      $region39: #{eca_layer_forward.2} parent=35 // pred_region
        %p198 = scmp.lt.s32.totalorder %s20, 1
        %s199 = scalar_select %p198, %s20, 1
        %p200 = scmp.lt.s32.totalorder %s21, 0
        %s201 = scalar_select %p200, %s21, 0
        %s202 = sadd.s32 %s201, %s199
        %s203 = smul.addr %s202, 8
        %s204 = scalar_lea.vmem %s1, %s203
      $region40: #{eca_layer_forward.2} parent=35 // pred_fallthru
        _
    $region36: #{eca_layer_forward.2} parent=5 // pred_fallthru
      _
  $region6: #{eca_layer_forward.2} parent=0 // loop_footer
    %s11 = sadd.s32 1, %s7
  $region7: #{eca_layer_forward.2} parent=0 // loop_footer_branch
    %6 = sbr.rel target = $region3
  $region8: #{eca_layer_forward.2} parent=0 // loop_exit
    _

// kernel: eca_layer_forward.3
$region0: #{eca_layer_forward.3}
  #allocation0 [shape = 'u32[]', space=smem, size = 0x4, offset = 0x4, fixed_abs, tag = 'smem constant byte address 0x4 - core index']
  #allocation1 [shape = 'u32[144,128]{1,0:T(1,128)}', space=vmem, size = 0x12000, scoped, tag = 'internal scratch']
  #allocation2 [shape = 's32[6]{0}', space=sflag, size = 0x18, scoped, tag = 'scratch operand']
  #allocation3 [shape = 's32[1]{0}', space=sflag, size = 0x4, scoped, tag = 'scoped memory for eca_layer_forward.3']
  #allocation4 [shape = 'u8[1024]{0}', space=smem, size = 0x400, scoped, tag = 'prefetched SMEM operand 0']
  #allocation5 [shape = 's32[]', space=sflag, size = 0x4, offset = 0, fixed_abs, tag = 'sflag constant byte address 0x0 - dummy sync flag']
  #allocation6 [shape = 's32[]', space=sflag, size = 0x4, offset = 0, fixed_abs, tag = 'sflag constant byte address 0x0 - dummy sync flag']
  #allocation7 [shape = 's32[]', space=sflag, size = 0x4, offset = 0, fixed_abs, tag = 'sflag constant byte address 0x0 - dummy sync flag']
  #allocation8 [shape = 's32[]', space=sflag, size = 0x4, offset = 0, fixed_abs, tag = 'sflag constant byte address 0x0 - dummy sync flag']
  #allocation9 [shape = 's32[]', space=sflag, size = 0x4, offset = 0, fixed_abs, tag = 'sflag constant byte address 0x0 - dummy sync flag']
  #allocation10 [shape = 's32[]', space=sflag, size = 0x4, offset = 0, fixed_abs, tag = 'sflag constant byte address 0x0 - dummy sync flag']
  %s0 = inlined_call_operand.vmem [shape: s32[2,3], index: 0, kind: input, shape index: {}]
  %s1 = inlined_call_operand.vmem [shape: f32[2,8,256], index: 1, kind: input, shape index: {}]
  %s2 = inlined_call_operand.vmem [shape: f32[2,3,256], index: 2, kind: output, shape index: {}]
  %s3 = sld [smem:[#allocation0]]
  $region182: #{eca_layer_forward.3} parent=0
    _
  %s5 = ssub.s32 1, %s3
  %s6 = scalar_select 0, %s5, %s3
  %s7 = sshll.u32 %s0, 4
  %s8 = int_to_ptr.vmem [resolvable:$true] %s7
  %10 = dma.vmem_to_smem %s8, 32, [#allocation4], [#allocation3]
  %11 = dma.done [#allocation3], 32
  %12 = sfence
  %s13 = smul.u32 0, 2
  %s14 = smul.u32 %s13, 128
  %s15 = sld [smem:[#allocation4 + %s14]]
  %s16 = sshrl.u32 %s15, 3
  %s17 = sand.u32 %s15, 7
  %s18 = smul.u32 %s16, 16
  %s19 = sadd.s32 %s17, %s18
  %s20 = smul.u32 %s13, 16
  %s21 = sadd.s32 %s19, %s20
  %s22 = scalar_lea.vmem %s1, %s21
  %s23 = smul.u32 %s13, 8
  %s24 = scalar_lea.vmem %s2, %s23
  %p26 = scmp.lt.u32.totalorder 1, 8
  %p27 = pneg %p26
  // Predicated region
  $region2: #{eca_layer_forward.3} parent=0 // pred_check
    _
  $region3: #{eca_layer_forward.3} parent=0 // pred_check_branch
    %29 = sbr.rel (%p26) target = $region5
  $region4: #{eca_layer_forward.3} parent=0 // pred_region
    %s47 = sand.u32 1, 7
    %p48 = scmp.eq.s32.totalorder %s47, 0
    %p49 = pneg %p48
    // Predicated region
    $region17: #{eca_layer_forward.3} parent=4 // pred_check
      _
    $region18: #{eca_layer_forward.3} parent=4 // pred_check_branch
      %51 = sbr.rel (%p48) target = $region20
    $region19: #{eca_layer_forward.3} parent=4 // pred_region
      %s52 = sand.u32 1, 7
      %s53 = ssub.s32 1, %s52
      %s54 = scalar_lea.vmem %s22, %s53
      %s55 = ssub.s32 1, %s52
      %s56 = scalar_lea.vmem %s24, %s55
      %s57 = sshll.u32 1, %s52
      %s58 = ssub.s32 %s57, 1
      loop: start=0, step=1, limit=1
      $region21: #{eca_layer_forward.3} parent=19 // loop_pre_header
        _
      $region22: #{eca_layer_forward.3} parent=19 // loop_header
        %s60 = sphi 0, %s64
        %p61 = scmp.ge.s32.totalorder %s60, 1
        %s65 = sphi %s54, %s54
        %s66 = sphi %s56, %s56
      $region23: #{eca_layer_forward.3} parent=19 // loop_header_branch
        %63 = sbr.rel (%p61) target = $region27
      $region24: #{eca_layer_forward.3} parent=19 // loop_body
        %v67 = vld [vmem:[%s65] sm:%s58]
        %68 = vst [vmem:[%s66] sm:%s58] %v67
        %v69 = vld [vmem:[%s65 + $0x8] sm:%s58]
        %70 = vst [vmem:[%s66 + $0x4] sm:%s58] %v69
      $region25: #{eca_layer_forward.3} parent=19 // loop_footer
        %s64 = sadd.s32 1, %s60
      $region26: #{eca_layer_forward.3} parent=19 // loop_footer_branch
        %59 = sbr.rel target = $region22
      $region27: #{eca_layer_forward.3} parent=19 // loop_exit
        _
    $region20: #{eca_layer_forward.3} parent=4 // pred_fallthru
      _
  $region5: #{eca_layer_forward.3} parent=0 // pred_fallthru
    _
  // Predicated region
  $region6: #{eca_layer_forward.3} parent=0 // pred_check
    %p30 = pneg %p26
  $region7: #{eca_layer_forward.3} parent=0 // pred_check_branch
    %32 = sbr.rel (%p30) target = $region9
  $region8: #{eca_layer_forward.3} parent=0 // pred_region
    %s33 = sshll.u32 1, 1
    %s34 = ssub.s32 %s33, 1
    loop: start=0, step=1, limit=1
    $region10: #{eca_layer_forward.3} parent=8 // loop_pre_header
      _
    $region11: #{eca_layer_forward.3} parent=8 // loop_header
      %s36 = sphi 0, %s40
      %p37 = scmp.ge.s32.totalorder %s36, 1
      %s41 = sphi %s22, %s22
      %s42 = sphi %s24, %s24
    $region12: #{eca_layer_forward.3} parent=8 // loop_header_branch
      %39 = sbr.rel (%p37) target = $region16
    $region13: #{eca_layer_forward.3} parent=8 // loop_body
      %v43 = vld [vmem:[%s41] sm:%s34]
      %44 = vst [vmem:[%s42] sm:%s34] %v43
      %v45 = vld [vmem:[%s41 + $0x8] sm:%s34]
      %46 = vst [vmem:[%s42 + $0x4] sm:%s34] %v45
    $region14: #{eca_layer_forward.3} parent=8 // loop_footer
      %s40 = sadd.s32 1, %s36
    $region15: #{eca_layer_forward.3} parent=8 // loop_footer_branch
      %35 = sbr.rel target = $region11
    $region16: #{eca_layer_forward.3} parent=8 // loop_exit
      _
  $region9: #{eca_layer_forward.3} parent=0 // pred_fallthru
    _
  // Predicated region
  $region28: #{eca_layer_forward.3} parent=0 // pred_check
    _
  $region29: #{eca_layer_forward.3} parent=0 // pred_check_branch
    %73 = sbr.rel (0) target = $region31
  $region30: #{eca_layer_forward.3} parent=0 // pred_region
    %74 = vsyncadd [#allocation2], 32
  $region31: #{eca_layer_forward.3} parent=0 // pred_fallthru
    _
  %s75 = sadd.s32 %s14, 1
  %s76 = sld [smem:[#allocation4 + %s75]]
  %s77 = sshrl.u32 %s76, 3
  %s78 = sand.u32 %s76, 7
  %s79 = smul.u32 %s77, 16
  %s80 = sadd.s32 %s78, %s79
  %s81 = sadd.s32 %s80, %s20
  %s82 = scalar_lea.vmem %s1, %s81
  %s83 = sadd.s32 1, %s23
  %s84 = scalar_lea.vmem %s2, %s83
  %s85 = scalar_lea.sflag [#allocation2], 1
  %p87 = scmp.lt.u32.totalorder 1, 8
  %p88 = pneg %p87
  // Predicated region
  $region32: #{eca_layer_forward.3} parent=0 // pred_check
    _
  $region33: #{eca_layer_forward.3} parent=0 // pred_check_branch
    %90 = sbr.rel (%p87) target = $region35
  $region34: #{eca_layer_forward.3} parent=0 // pred_region
    %s108 = sand.u32 1, 7
    %p109 = scmp.eq.s32.totalorder %s108, 0
    %p110 = pneg %p109
    // Predicated region
    $region47: #{eca_layer_forward.3} parent=34 // pred_check
      _
    $region48: #{eca_layer_forward.3} parent=34 // pred_check_branch
      %112 = sbr.rel (%p109) target = $region50
    $region49: #{eca_layer_forward.3} parent=34 // pred_region
      %s113 = sand.u32 1, 7
      %s114 = ssub.s32 1, %s113
      %s115 = scalar_lea.vmem %s82, %s114
      %s116 = ssub.s32 1, %s113
      %s117 = scalar_lea.vmem %s84, %s116
      %s118 = sshll.u32 1, %s113
      %s119 = ssub.s32 %s118, 1
      loop: start=0, step=1, limit=1
      $region51: #{eca_layer_forward.3} parent=49 // loop_pre_header
        _
      $region52: #{eca_layer_forward.3} parent=49 // loop_header
        %s121 = sphi 0, %s125
        %p122 = scmp.ge.s32.totalorder %s121, 1
        %s126 = sphi %s115, %s115
        %s127 = sphi %s117, %s117
      $region53: #{eca_layer_forward.3} parent=49 // loop_header_branch
        %124 = sbr.rel (%p122) target = $region57
      $region54: #{eca_layer_forward.3} parent=49 // loop_body
        %v128 = vld [vmem:[%s126] sm:%s119]
        %129 = vst [vmem:[%s127] sm:%s119] %v128
        %v130 = vld [vmem:[%s126 + $0x8] sm:%s119]
        %131 = vst [vmem:[%s127 + $0x4] sm:%s119] %v130
      $region55: #{eca_layer_forward.3} parent=49 // loop_footer
        %s125 = sadd.s32 1, %s121
      $region56: #{eca_layer_forward.3} parent=49 // loop_footer_branch
        %120 = sbr.rel target = $region52
      $region57: #{eca_layer_forward.3} parent=49 // loop_exit
        _
    $region50: #{eca_layer_forward.3} parent=34 // pred_fallthru
      _
  $region35: #{eca_layer_forward.3} parent=0 // pred_fallthru
    _
  // Predicated region
  $region36: #{eca_layer_forward.3} parent=0 // pred_check
    %p91 = pneg %p87
  $region37: #{eca_layer_forward.3} parent=0 // pred_check_branch
    %93 = sbr.rel (%p91) target = $region39
  $region38: #{eca_layer_forward.3} parent=0 // pred_region
    %s94 = sshll.u32 1, 1
    %s95 = ssub.s32 %s94, 1
    loop: start=0, step=1, limit=1
    $region40: #{eca_layer_forward.3} parent=38 // loop_pre_header
      _
    $region41: #{eca_layer_forward.3} parent=38 // loop_header
      %s97 = sphi 0, %s101
      %p98 = scmp.ge.s32.totalorder %s97, 1
      %s102 = sphi %s82, %s82
      %s103 = sphi %s84, %s84
    $region42: #{eca_layer_forward.3} parent=38 // loop_header_branch
      %100 = sbr.rel (%p98) target = $region46
    $region43: #{eca_layer_forward.3} parent=38 // loop_body
      %v104 = vld [vmem:[%s102] sm:%s95]
      %105 = vst [vmem:[%s103] sm:%s95] %v104
      %v106 = vld [vmem:[%s102 + $0x8] sm:%s95]
      %107 = vst [vmem:[%s103 + $0x4] sm:%s95] %v106
    $region44: #{eca_layer_forward.3} parent=38 // loop_footer
      %s101 = sadd.s32 1, %s97
    $region45: #{eca_layer_forward.3} parent=38 // loop_footer_branch
      %96 = sbr.rel target = $region41
    $region46: #{eca_layer_forward.3} parent=38 // loop_exit
      _
  $region39: #{eca_layer_forward.3} parent=0 // pred_fallthru
    _
  // Predicated region
  $region58: #{eca_layer_forward.3} parent=0 // pred_check
    _
  $region59: #{eca_layer_forward.3} parent=0 // pred_check_branch
    %134 = sbr.rel (0) target = $region61
  $region60: #{eca_layer_forward.3} parent=0 // pred_region
    %135 = vsyncadd %s85, 32
  $region61: #{eca_layer_forward.3} parent=0 // pred_fallthru
    _
  %s136 = sadd.s32 %s14, 2
  %s137 = sld [smem:[#allocation4 + %s136]]
  %s138 = sshrl.u32 %s137, 3
  %s139 = sand.u32 %s137, 7
  %s140 = smul.u32 %s138, 16
  %s141 = sadd.s32 %s139, %s140
  %s142 = sadd.s32 %s141, %s20
  %s143 = scalar_lea.vmem %s1, %s142
  %s144 = sadd.s32 2, %s23
  %s145 = scalar_lea.vmem %s2, %s144
  %s146 = scalar_lea.sflag [#allocation2], 2
  %p148 = scmp.lt.u32.totalorder 1, 8
  %p149 = pneg %p148
  // Predicated region
  $region62: #{eca_layer_forward.3} parent=0 // pred_check
    _
  $region63: #{eca_layer_forward.3} parent=0 // pred_check_branch
    %151 = sbr.rel (%p148) target = $region65
  $region64: #{eca_layer_forward.3} parent=0 // pred_region
    %s169 = sand.u32 1, 7
    %p170 = scmp.eq.s32.totalorder %s169, 0
    %p171 = pneg %p170
    // Predicated region
    $region77: #{eca_layer_forward.3} parent=64 // pred_check
      _
    $region78: #{eca_layer_forward.3} parent=64 // pred_check_branch
      %173 = sbr.rel (%p170) target = $region80
    $region79: #{eca_layer_forward.3} parent=64 // pred_region
      %s174 = sand.u32 1, 7
      %s175 = ssub.s32 1, %s174
      %s176 = scalar_lea.vmem %s143, %s175
      %s177 = ssub.s32 1, %s174
      %s178 = scalar_lea.vmem %s145, %s177
      %s179 = sshll.u32 1, %s174
      %s180 = ssub.s32 %s179, 1
      loop: start=0, step=1, limit=1
      $region81: #{eca_layer_forward.3} parent=79 // loop_pre_header
        _
      $region82: #{eca_layer_forward.3} parent=79 // loop_header
        %s182 = sphi 0, %s186
        %p183 = scmp.ge.s32.totalorder %s182, 1
        %s187 = sphi %s176, %s176
        %s188 = sphi %s178, %s178
      $region83: #{eca_layer_forward.3} parent=79 // loop_header_branch
        %185 = sbr.rel (%p183) target = $region87
      $region84: #{eca_layer_forward.3} parent=79 // loop_body
        %v189 = vld [vmem:[%s187] sm:%s180]
        %190 = vst [vmem:[%s188] sm:%s180] %v189
        %v191 = vld [vmem:[%s187 + $0x8] sm:%s180]
        %192 = vst [vmem:[%s188 + $0x4] sm:%s180] %v191
      $region85: #{eca_layer_forward.3} parent=79 // loop_footer
        %s186 = sadd.s32 1, %s182
      $region86: #{eca_layer_forward.3} parent=79 // loop_footer_branch
        %181 = sbr.rel target = $region82
      $region87: #{eca_layer_forward.3} parent=79 // loop_exit
        _
    $region80: #{eca_layer_forward.3} parent=64 // pred_fallthru
      _
  $region65: #{eca_layer_forward.3} parent=0 // pred_fallthru
    _
  // Predicated region
  $region66: #{eca_layer_forward.3} parent=0 // pred_check
    %p152 = pneg %p148
  $region67: #{eca_layer_forward.3} parent=0 // pred_check_branch
    %154 = sbr.rel (%p152) target = $region69
  $region68: #{eca_layer_forward.3} parent=0 // pred_region
    %s155 = sshll.u32 1, 1
    %s156 = ssub.s32 %s155, 1
    loop: start=0, step=1, limit=1
    $region70: #{eca_layer_forward.3} parent=68 // loop_pre_header
      _
    $region71: #{eca_layer_forward.3} parent=68 // loop_header
      %s158 = sphi 0, %s162
      %p159 = scmp.ge.s32.totalorder %s158, 1
      %s163 = sphi %s143, %s143
      %s164 = sphi %s145, %s145
    $region72: #{eca_layer_forward.3} parent=68 // loop_header_branch
      %161 = sbr.rel (%p159) target = $region76
    $region73: #{eca_layer_forward.3} parent=68 // loop_body
      %v165 = vld [vmem:[%s163] sm:%s156]
      %166 = vst [vmem:[%s164] sm:%s156] %v165
      %v167 = vld [vmem:[%s163 + $0x8] sm:%s156]
      %168 = vst [vmem:[%s164 + $0x4] sm:%s156] %v167
    $region74: #{eca_layer_forward.3} parent=68 // loop_footer
      %s162 = sadd.s32 1, %s158
    $region75: #{eca_layer_forward.3} parent=68 // loop_footer_branch
      %157 = sbr.rel target = $region71
    $region76: #{eca_layer_forward.3} parent=68 // loop_exit
      _
  $region69: #{eca_layer_forward.3} parent=0 // pred_fallthru
    _
  // Predicated region
  $region88: #{eca_layer_forward.3} parent=0 // pred_check
    _
  $region89: #{eca_layer_forward.3} parent=0 // pred_check_branch
    %195 = sbr.rel (0) target = $region91
  $region90: #{eca_layer_forward.3} parent=0 // pred_region
    %196 = vsyncadd %s146, 32
  $region91: #{eca_layer_forward.3} parent=0 // pred_fallthru
    _
  %s197 = sadd.s32 %s13, 1
  %s198 = smul.u32 %s197, 128
  %s199 = sld [smem:[#allocation4 + %s198]]
  %s200 = sshrl.u32 %s199, 3
  %s201 = sand.u32 %s199, 7
  %s202 = smul.u32 %s200, 16
  %s203 = sadd.s32 %s201, %s202
  %s204 = smul.u32 %s197, 16
  %s205 = sadd.s32 %s203, %s204
  %s206 = scalar_lea.vmem %s1, %s205
  %s207 = smul.u32 %s197, 8
  %s208 = scalar_lea.vmem %s2, %s207
  %s209 = scalar_lea.sflag [#allocation2], 3
  %p211 = scmp.lt.u32.totalorder 1, 8
  %p212 = pneg %p211
  // Predicated region
  $region92: #{eca_layer_forward.3} parent=0 // pred_check
    _
  $region93: #{eca_layer_forward.3} parent=0 // pred_check_branch
    %214 = sbr.rel (%p211) target = $region95
  $region94: #{eca_layer_forward.3} parent=0 // pred_region
    %s232 = sand.u32 1, 7
    %p233 = scmp.eq.s32.totalorder %s232, 0
    %p234 = pneg %p233
    // Predicated region
    $region107: #{eca_layer_forward.3} parent=94 // pred_check
      _
    $region108: #{eca_layer_forward.3} parent=94 // pred_check_branch
      %236 = sbr.rel (%p233) target = $region110
    $region109: #{eca_layer_forward.3} parent=94 // pred_region
      %s237 = sand.u32 1, 7
      %s238 = ssub.s32 1, %s237
      %s239 = scalar_lea.vmem %s206, %s238
      %s240 = ssub.s32 1, %s237
      %s241 = scalar_lea.vmem %s208, %s240
      %s242 = sshll.u32 1, %s237
      %s243 = ssub.s32 %s242, 1
      loop: start=0, step=1, limit=1
      $region111: #{eca_layer_forward.3} parent=109 // loop_pre_header
        _
      $region112: #{eca_layer_forward.3} parent=109 // loop_header
        %s245 = sphi 0, %s249
        %p246 = scmp.ge.s32.totalorder %s245, 1
        %s250 = sphi %s239, %s239
        %s251 = sphi %s241, %s241
      $region113: #{eca_layer_forward.3} parent=109 // loop_header_branch
        %248 = sbr.rel (%p246) target = $region117
      $region114: #{eca_layer_forward.3} parent=109 // loop_body
        %v252 = vld [vmem:[%s250] sm:%s243]
        %253 = vst [vmem:[%s251] sm:%s243] %v252
        %v254 = vld [vmem:[%s250 + $0x8] sm:%s243]
        %255 = vst [vmem:[%s251 + $0x4] sm:%s243] %v254
      $region115: #{eca_layer_forward.3} parent=109 // loop_footer
        %s249 = sadd.s32 1, %s245
      $region116: #{eca_layer_forward.3} parent=109 // loop_footer_branch
        %244 = sbr.rel target = $region112
      $region117: #{eca_layer_forward.3} parent=109 // loop_exit
        _
    $region110: #{eca_layer_forward.3} parent=94 // pred_fallthru
      _
  $region95: #{eca_layer_forward.3} parent=0 // pred_fallthru
    _
  // Predicated region
  $region96: #{eca_layer_forward.3} parent=0 // pred_check
    %p215 = pneg %p211
  $region97: #{eca_layer_forward.3} parent=0 // pred_check_branch
    %217 = sbr.rel (%p215) target = $region99
  $region98: #{eca_layer_forward.3} parent=0 // pred_region
    %s218 = sshll.u32 1, 1
    %s219 = ssub.s32 %s218, 1
    loop: start=0, step=1, limit=1
    $region100: #{eca_layer_forward.3} parent=98 // loop_pre_header
      _
    $region101: #{eca_layer_forward.3} parent=98 // loop_header
      %s221 = sphi 0, %s225
      %p222 = scmp.ge.s32.totalorder %s221, 1
      %s226 = sphi %s206, %s206
      %s227 = sphi %s208, %s208
    $region102: #{eca_layer_forward.3} parent=98 // loop_header_branch
      %224 = sbr.rel (%p222) target = $region106
    $region103: #{eca_layer_forward.3} parent=98 // loop_body
      %v228 = vld [vmem:[%s226] sm:%s219]
      %229 = vst [vmem:[%s227] sm:%s219] %v228
      %v230 = vld [vmem:[%s226 + $0x8] sm:%s219]
      %231 = vst [vmem:[%s227 + $0x4] sm:%s219] %v230
    $region104: #{eca_layer_forward.3} parent=98 // loop_footer
      %s225 = sadd.s32 1, %s221
    $region105: #{eca_layer_forward.3} parent=98 // loop_footer_branch
      %220 = sbr.rel target = $region101
    $region106: #{eca_layer_forward.3} parent=98 // loop_exit
      _
  $region99: #{eca_layer_forward.3} parent=0 // pred_fallthru
    _
  // Predicated region
  $region118: #{eca_layer_forward.3} parent=0 // pred_check
    _
  $region119: #{eca_layer_forward.3} parent=0 // pred_check_branch
    %258 = sbr.rel (0) target = $region121
  $region120: #{eca_layer_forward.3} parent=0 // pred_region
    %259 = vsyncadd %s209, 32
  $region121: #{eca_layer_forward.3} parent=0 // pred_fallthru
    _
  %s260 = sadd.s32 %s198, 1
  %s261 = sld [smem:[#allocation4 + %s260]]
  %s262 = sshrl.u32 %s261, 3
  %s263 = sand.u32 %s261, 7
  %s264 = smul.u32 %s262, 16
  %s265 = sadd.s32 %s263, %s264
  %s266 = sadd.s32 %s265, %s204
  %s267 = scalar_lea.vmem %s1, %s266
  %s268 = sadd.s32 1, %s207
  %s269 = scalar_lea.vmem %s2, %s268
  %s270 = scalar_lea.sflag [#allocation2], 4
  %p272 = scmp.lt.u32.totalorder 1, 8
  %p273 = pneg %p272
  // Predicated region
  $region122: #{eca_layer_forward.3} parent=0 // pred_check
    _
  $region123: #{eca_layer_forward.3} parent=0 // pred_check_branch
    %275 = sbr.rel (%p272) target = $region125
  $region124: #{eca_layer_forward.3} parent=0 // pred_region
    %s293 = sand.u32 1, 7
    %p294 = scmp.eq.s32.totalorder %s293, 0
    %p295 = pneg %p294
    // Predicated region
    $region137: #{eca_layer_forward.3} parent=124 // pred_check
      _
    $region138: #{eca_layer_forward.3} parent=124 // pred_check_branch
      %297 = sbr.rel (%p294) target = $region140
    $region139: #{eca_layer_forward.3} parent=124 // pred_region
      %s298 = sand.u32 1, 7
      %s299 = ssub.s32 1, %s298
      %s300 = scalar_lea.vmem %s267, %s299
      %s301 = ssub.s32 1, %s298
      %s302 = scalar_lea.vmem %s269, %s301
      %s303 = sshll.u32 1, %s298
      %s304 = ssub.s32 %s303, 1
      loop: start=0, step=1, limit=1
      $region141: #{eca_layer_forward.3} parent=139 // loop_pre_header
        _
      $region142: #{eca_layer_forward.3} parent=139 // loop_header
        %s306 = sphi 0, %s310
        %p307 = scmp.ge.s32.totalorder %s306, 1
        %s311 = sphi %s300, %s300
        %s312 = sphi %s302, %s302
      $region143: #{eca_layer_forward.3} parent=139 // loop_header_branch
        %309 = sbr.rel (%p307) target = $region147
      $region144: #{eca_layer_forward.3} parent=139 // loop_body
        %v313 = vld [vmem:[%s311] sm:%s304]
        %314 = vst [vmem:[%s312] sm:%s304] %v313
        %v315 = vld [vmem:[%s311 + $0x8] sm:%s304]
        %316 = vst [vmem:[%s312 + $0x4] sm:%s304] %v315
      $region145: #{eca_layer_forward.3} parent=139 // loop_footer
        %s310 = sadd.s32 1, %s306
      $region146: #{eca_layer_forward.3} parent=139 // loop_footer_branch
        %305 = sbr.rel target = $region142
      $region147: #{eca_layer_forward.3} parent=139 // loop_exit
        _
    $region140: #{eca_layer_forward.3} parent=124 // pred_fallthru
      _
  $region125: #{eca_layer_forward.3} parent=0 // pred_fallthru
    _
  // Predicated region
  $region126: #{eca_layer_forward.3} parent=0 // pred_check
    %p276 = pneg %p272
  $region127: #{eca_layer_forward.3} parent=0 // pred_check_branch
    %278 = sbr.rel (%p276) target = $region129
  $region128: #{eca_layer_forward.3} parent=0 // pred_region
    %s279 = sshll.u32 1, 1
    %s280 = ssub.s32 %s279, 1
    loop: start=0, step=1, limit=1
    $region130: #{eca_layer_forward.3} parent=128 // loop_pre_header
      _
    $region131: #{eca_layer_forward.3} parent=128 // loop_header
      %s282 = sphi 0, %s286
      %p283 = scmp.ge.s32.totalorder %s282, 1
      %s287 = sphi %s267, %s267
      %s288 = sphi %s269, %s269
    $region132: #{eca_layer_forward.3} parent=128 // loop_header_branch
      %285 = sbr.rel (%p283) target = $region136
    $region133: #{eca_layer_forward.3} parent=128 // loop_body
      %v289 = vld [vmem:[%s287] sm:%s280]
      %290 = vst [vmem:[%s288] sm:%s280] %v289
      %v291 = vld [vmem:[%s287 + $0x8] sm:%s280]
      %292 = vst [vmem:[%s288 + $0x4] sm:%s280] %v291
    $region134: #{eca_layer_forward.3} parent=128 // loop_footer
      %s286 = sadd.s32 1, %s282
    $region135: #{eca_layer_forward.3} parent=128 // loop_footer_branch
      %281 = sbr.rel target = $region131
    $region136: #{eca_layer_forward.3} parent=128 // loop_exit
      _
  $region129: #{eca_layer_forward.3} parent=0 // pred_fallthru
    _
  // Predicated region
  $region148: #{eca_layer_forward.3} parent=0 // pred_check
    _
  $region149: #{eca_layer_forward.3} parent=0 // pred_check_branch
    %319 = sbr.rel (0) target = $region151
  $region150: #{eca_layer_forward.3} parent=0 // pred_region
    %320 = vsyncadd %s270, 32
  $region151: #{eca_layer_forward.3} parent=0 // pred_fallthru
    _
  %s321 = sadd.s32 %s198, 2
  %s322 = sld [smem:[#allocation4 + %s321]]
  %s323 = sshrl.u32 %s322, 3
  %s324 = sand.u32 %s322, 7
  %s325 = smul.u32 %s323, 16
  %s326 = sadd.s32 %s324, %s325
  %s327 = sadd.s32 %s326, %s204
  %s328 = scalar_lea.vmem %s1, %s327
  %s329 = sadd.s32 2, %s207
  %s330 = scalar_lea.vmem %s2, %s329
  %s331 = scalar_lea.sflag [#allocation2], 5
  %p333 = scmp.lt.u32.totalorder 1, 8
  %p334 = pneg %p333
  // Predicated region
  $region152: #{eca_layer_forward.3} parent=0 // pred_check
    _
  $region153: #{eca_layer_forward.3} parent=0 // pred_check_branch
    %336 = sbr.rel (%p333) target = $region155
  $region154: #{eca_layer_forward.3} parent=0 // pred_region
    %s354 = sand.u32 1, 7
    %p355 = scmp.eq.s32.totalorder %s354, 0
    %p356 = pneg %p355
    // Predicated region
    $region167: #{eca_layer_forward.3} parent=154 // pred_check
      _
    $region168: #{eca_layer_forward.3} parent=154 // pred_check_branch
      %358 = sbr.rel (%p355) target = $region170
    $region169: #{eca_layer_forward.3} parent=154 // pred_region
      %s359 = sand.u32 1, 7
      %s360 = ssub.s32 1, %s359
      %s361 = scalar_lea.vmem %s328, %s360
      %s362 = ssub.s32 1, %s359
      %s363 = scalar_lea.vmem %s330, %s362
      %s364 = sshll.u32 1, %s359
      %s365 = ssub.s32 %s364, 1
      loop: start=0, step=1, limit=1
      $region171: #{eca_layer_forward.3} parent=169 // loop_pre_header
        _
      $region172: #{eca_layer_forward.3} parent=169 // loop_header
        %s367 = sphi 0, %s371
        %p368 = scmp.ge.s32.totalorder %s367, 1
        %s372 = sphi %s361, %s361
        %s373 = sphi %s363, %s363
      $region173: #{eca_layer_forward.3} parent=169 // loop_header_branch
        %370 = sbr.rel (%p368) target = $region177
      $region174: #{eca_layer_forward.3} parent=169 // loop_body
        %v374 = vld [vmem:[%s372] sm:%s365]
        %375 = vst [vmem:[%s373] sm:%s365] %v374
        %v376 = vld [vmem:[%s372 + $0x8] sm:%s365]
        %377 = vst [vmem:[%s373 + $0x4] sm:%s365] %v376
      $region175: #{eca_layer_forward.3} parent=169 // loop_footer
        %s371 = sadd.s32 1, %s367
      $region176: #{eca_layer_forward.3} parent=169 // loop_footer_branch
        %366 = sbr.rel target = $region172
      $region177: #{eca_layer_forward.3} parent=169 // loop_exit
        _
    $region170: #{eca_layer_forward.3} parent=154 // pred_fallthru
      _
  $region155: #{eca_layer_forward.3} parent=0 // pred_fallthru
    _
  // Predicated region
  $region156: #{eca_layer_forward.3} parent=0 // pred_check
    %p337 = pneg %p333
  $region157: #{eca_layer_forward.3} parent=0 // pred_check_branch
    %339 = sbr.rel (%p337) target = $region159
  $region158: #{eca_layer_forward.3} parent=0 // pred_region
    %s340 = sshll.u32 1, 1
    %s341 = ssub.s32 %s340, 1
    loop: start=0, step=1, limit=1
    $region160: #{eca_layer_forward.3} parent=158 // loop_pre_header
      _
    $region161: #{eca_layer_forward.3} parent=158 // loop_header
      %s343 = sphi 0, %s347
      %p344 = scmp.ge.s32.totalorder %s343, 1
      %s348 = sphi %s328, %s328
      %s349 = sphi %s330, %s330
    $region162: #{eca_layer_forward.3} parent=158 // loop_header_branch
      %346 = sbr.rel (%p344) target = $region166
    $region163: #{eca_layer_forward.3} parent=158 // loop_body
      %v350 = vld [vmem:[%s348] sm:%s341]
      %351 = vst [vmem:[%s349] sm:%s341] %v350
      %v352 = vld [vmem:[%s348 + $0x8] sm:%s341]
      %353 = vst [vmem:[%s349 + $0x4] sm:%s341] %v352
    $region164: #{eca_layer_forward.3} parent=158 // loop_footer
      %s347 = sadd.s32 1, %s343
    $region165: #{eca_layer_forward.3} parent=158 // loop_footer_branch
      %342 = sbr.rel target = $region161
    $region166: #{eca_layer_forward.3} parent=158 // loop_exit
      _
  $region159: #{eca_layer_forward.3} parent=0 // pred_fallthru
    _
  // Predicated region
  $region178: #{eca_layer_forward.3} parent=0 // pred_check
    _
  $region179: #{eca_layer_forward.3} parent=0 // pred_check_branch
    %380 = sbr.rel (0) target = $region181
  $region180: #{eca_layer_forward.3} parent=0 // pred_region
    %381 = vsyncadd %s331, 32
  $region181: #{eca_layer_forward.3} parent=0 // pred_fallthru
    _
  %s382 = sld [smem:[#allocation4 + %s14]]
  %384 = dma.done [#allocation2], 32
  %s385 = sld [smem:[#allocation4 + %s75]]
  %387 = dma.done %s85, 32
  %s388 = sld [smem:[#allocation4 + %s136]]
  %390 = dma.done %s146, 32
  %s391 = sld [smem:[#allocation4 + %s198]]
  %393 = dma.done %s209, 32
  %s394 = sld [smem:[#allocation4 + %s260]]
  %396 = dma.done %s270, 32
  %s397 = sld [smem:[#allocation4 + %s321]]
  %399 = dma.done %s331, 32
  %400 = vsyncmov [#allocation2]
  %s401 = vpop.sfrf %400
  %p402 = scmp.eq.s32.totalorder %s401, 0
  %p403 = pneg %p402
  %405 = shalt.err (%p403)
  %s406 = scalar_lea.sflag [#allocation2], 1
  %407 = vsyncmov %s406
  %s408 = vpop.sfrf %407
  %p409 = scmp.eq.s32.totalorder %s408, 0
  %p410 = pneg %p409
  %412 = shalt.err (%p410)
  %s413 = scalar_lea.sflag [#allocation2], 2
  %414 = vsyncmov %s413
  %s415 = vpop.sfrf %414
  %p416 = scmp.eq.s32.totalorder %s415, 0
  %p417 = pneg %p416
  %419 = shalt.err (%p417)
  %s420 = scalar_lea.sflag [#allocation2], 3
  %421 = vsyncmov %s420
  %s422 = vpop.sfrf %421
  %p423 = scmp.eq.s32.totalorder %s422, 0
  %p424 = pneg %p423
  %426 = shalt.err (%p424)
  %s427 = scalar_lea.sflag [#allocation2], 4
  %428 = vsyncmov %s427
  %s429 = vpop.sfrf %428
  %p430 = scmp.eq.s32.totalorder %s429, 0
  %p431 = pneg %p430
  %433 = shalt.err (%p431)
  %s434 = scalar_lea.sflag [#allocation2], 5
  %435 = vsyncmov %s434
  %s436 = vpop.sfrf %435
  %p437 = scmp.eq.s32.totalorder %s436, 0
  %p438 = pneg %p437
  %440 = shalt.err (%p438)

</llo_original>
